<compile_context>
chip_gen: v7x
topology: tpu7x:2x2x1
jax: 0.10.0
libtpu: 0.0.40
codegen_flags: <defaults>
</compile_context>

<pallas_src>
import functools

import jax
import jax.numpy as jnp
from jax.experimental import pallas as pl
from jax.experimental.pallas import tpu as pltpu


def _round_up(x: int, m: int) -> int:
    return ((x + m - 1) // m) * m


# Raise v5e's 16 MiB scoped-VMEM default; stays well inside every generation's
# physical VMEM (v5e/v6e 128 MiB, v7x 64 MiB).
_VMEM_LIMIT_BYTES = 32 * 1024 * 1024
# Working-set budget for the small-vocab one-hot path (headroom under limit).
_VMEM_BUDGET_BYTES = 24 * 1024 * 1024


def prepare_lookup_tables(uid_table, iid_table):
    """Load-time prep (call ONCE, e.g. right after the CSV load in __init__).

    Pads each vocab to a multiple of 128 rows and stacks the user table on top
    of the item table.  Optionally cast to bf16 here to halve DMA/VMEM (an
    accuracy-visible change, left to the caller).

    Returns (packed_table (U_pad + I_pad, D), u_rows_pad: item-table row offset).
    """
    U, D = uid_table.shape
    I, Di = iid_table.shape
    assert D == Di, "uid/iid embedding dims must match"
    U_pad = _round_up(U, 128)
    I_pad = _round_up(I, 128)
    packed = jnp.concatenate(
        [jnp.pad(uid_table, ((0, U_pad - U), (0, 0))),
         jnp.pad(iid_table, ((0, I_pad - I), (0, 0)))],
        axis=0,
    )
    return packed, U_pad


def _lookup_kernel(idx_ref, tab_ref, out_ref, *, u_rows_pad):
    # idx_ref : VMEM (TB, 2)           int32  batch tile of [uid, iid] pairs
    # tab_ref : VMEM (U_pad+I_pad, D)  f32    packed tables, VMEM-resident
    # out_ref : VMEM (TB, 2*D)         f32    [:, :D]=uid rows, [:, D:]=iid rows
    ids = idx_ref[...]
    tb = ids.shape[0]
    k_rows, d = tab_ref.shape

    # Row selectors into the packed table: uid rows address the top block,
    # iid rows the bottom block (offset by u_rows_pad).
    uid = ids[:, 0:1]                              # (TB, 1)
    iid = ids[:, 1:2] + u_rows_pad                 # (TB, 1)
    sel = jnp.concatenate([uid, iid], axis=0)      # (2*TB, 1)

    # Single fused one-hot gather on the MXU:
    #   onehot (2*TB, K) @ packed (K, D) -> (2*TB, D)
    # Exact 0/1 weights == the row gather.  Ids outside the valid vocab
    # (including the -1 batch padding) match no column -> all-zero row.
    # NOTE: torch.nn.Embedding would raise on out-of-range ids instead.
    col = jax.lax.broadcasted_iota(jnp.int32, (2 * tb, k_rows), 1)
    onehot = jnp.where(sel == col, 1.0, 0.0).astype(tab_ref.dtype)
    res = jnp.dot(onehot, tab_ref[...], preferred_element_type=jnp.float32)

    out_ref[:, :d] = res[:tb].astype(out_ref.dtype)   # uid rows, lane-dense slab
    out_ref[:, d:] = res[tb:].astype(out_ref.dtype)   # iid rows, lane-dense slab


def _build_call(*, n_tiles, tb, k_rows, d, u_rows_pad, out_dtype,
                single_buffer_tables, cost_estimate):
    # Constant index_map => the packed table is DMA'd to VMEM once and revisited
    # across batch tiles; with Buffered(1) it is also not pointlessly
    # double-buffered (halves resident table footprint).
    if single_buffer_tables:
        tab_spec = pl.BlockSpec((k_rows, d), lambda t: (0, 0),
                                pipeline_mode=pl.Buffered(1))
    else:
        tab_spec = pl.BlockSpec((k_rows, d), lambda t: (0, 0))

    grid_spec = pltpu.PrefetchScalarGridSpec(
        num_scalar_prefetch=0,
        grid=(n_tiles,),
        in_specs=[
            pl.BlockSpec((tb, 2), lambda t: (t, 0)),   # ids, per batch tile
            tab_spec,                                  # packed tables, resident
        ],
        out_specs=pl.BlockSpec((tb, 2 * d), lambda t: (t, 0)),
    )

    return pl.pallas_call(
        functools.partial(_lookup_kernel, u_rows_pad=u_rows_pad),
        grid_spec=grid_spec,
        out_shape=jax.ShapeDtypeStruct((n_tiles * tb, 2 * d), out_dtype),
        compiler_params=pltpu.CompilerParams(
            # Batch tiles are independent.  TODO(synk): on v7x use
            # pltpu.CORE_PARALLEL here (needs >=2 grid steps) to shard batch
            # tiles across the two TensorCores.
            dimension_semantics=("parallel",),
            vmem_limit_bytes=_VMEM_LIMIT_BYTES,
        ),
        cost_estimate=cost_estimate,
    )


def lookup_embedding_pretrain(x, packed_table, u_rows_pad, *, batch_tile=256):
    """Forward of LookupEmbeddingPretrain.

    x:            (B, 2) int ids (column 0 = uid, column 1 = iid).
    packed_table: output of prepare_lookup_tables (load-time prep).
    Returns (B, 2, D) float embeddings, equal to
    cat([uid_embedding(x[:,0])[:,None], iid_embedding(x[:,1])[:,None]], dim=1).
    """
    B = x.shape[0]
    k_rows, D = packed_table.shape
    itemsize = packed_table.dtype.itemsize

    # Batch tile: whole (8-padded) batch in one grid step when small, else
    # batch_tile-row tiles (sweep 256-512 for large B; bigger tiles amortize
    # the ~0.35 us per-grid-step overhead, especially on v7x).
    tb = _round_up(B, 8) if B <= batch_tile else batch_tile
    b_pad = _round_up(B, tb)
    n_tiles = b_pad // tb

    # VMEM working-set check for the small-vocab one-hot path: worst-case
    # double-buffered table, in-kernel one-hot + result scratch, and
    # double-buffered id/output tiles.
    table_bytes = k_rows * D * itemsize
    working_set = (
        2 * table_bytes                       # table (worst case 2 buffers)
        + 2 * tb * k_rows * 4                 # one-hot scratch (f32)
        + 2 * tb * D * 4                      # matmul result (f32)
        + 2 * (tb * 2 * D * itemsize)         # output tile, double-buffered
        + 2 * (tb * 2 * 4)                    # id tile, double-buffered
    )
    if working_set > _VMEM_BUDGET_BYTES:
        # TODO(synk): large-vocab path -- leave tables in HBM
        # (memory_space=pl.ANY) and gather rows via scalar-prefetched ids
        # driving a pl.Element(1) index_map / manual make_async_copy DMAs, or
        # jnp.take on a VMEM-resident table for mid-size vocabs.
        raise NotImplementedError(
            "one-hot gather path needs a VMEM-resident working set "
            f"({working_set} bytes > {_VMEM_BUDGET_BYTES} budget)")

    idx = x.astype(jnp.int32)
    if b_pad != B:
        # Pad ids with -1 (matches no table row) so padded rows are all-zero
        # rather than aliasing row 0; trimmed off after the call.
        idx = jnp.pad(idx, ((0, b_pad - B), (0, 0)), constant_values=-1)

    cost = pl.CostEstimate(
        flops=2 * (2 * b_pad) * k_rows * D,
        transcendentals=0,
        bytes_accessed=table_bytes + b_pad * 2 * 4 + b_pad * 2 * D * itemsize,
    )

    def _run(single_buffer_tables):
        call = _build_call(
            n_tiles=n_tiles, tb=tb, k_rows=k_rows, d=D,
            u_rows_pad=u_rows_pad, out_dtype=packed_table.dtype,
            single_buffer_tables=single_buffer_tables, cost_estimate=cost)
        return call(idx, packed_table)

    try:
        out2d = _run(True)
    except Exception:
        # pipeline_mode=pl.Buffered(1) not supported on this jax/libtpu;
        # fall back to default (double-buffered) table blocks.
        out2d = _run(False)

    if b_pad != B:
        out2d = out2d[:B]
    # Layout plumbing only: (B, 2*D) -> (B, 2, D) is a free row-major reshape.
    return out2d.reshape(B, 2, D)


if __name__ == "__main__":
    key = jax.random.PRNGKey(0)
    uid_all, iid_all, emb_dim = 32, 16, 128
    B = 8

    keys = jax.random.split(key, 10)
    # Deterministic stand-ins for the CSV-loaded pretrained tables built in
    # __init__.  Only uid_embedding / iid_embedding are read by forward(); the
    # other six are constructed for shape fidelity only.
    u_uiu   = jax.random.normal(keys[0], (uid_all, emb_dim), jnp.float32)
    u_uiciu = jax.random.normal(keys[1], (uid_all, emb_dim), jnp.float32)
    u_uibiu = jax.random.normal(keys[2], (uid_all, emb_dim), jnp.float32)
    u_pre   = jax.random.normal(keys[3], (uid_all, emb_dim), jnp.float32)      # uid_embedding
    i_iui   = jax.random.normal(keys[4], (iid_all + 1, emb_dim), jnp.float32)
    i_ici   = jax.random.normal(keys[5], (iid_all + 1, emb_dim), jnp.float32)
    i_ibi   = jax.random.normal(keys[6], (iid_all + 1, emb_dim), jnp.float32)
    i_pre   = jax.random.normal(keys[7], (iid_all + 1, emb_dim), jnp.float32)  # iid_embedding

    uids = jax.random.randint(keys[8], (B,), 0, uid_all, jnp.int32)
    iids = jax.random.randint(keys[9], (B,), 0, iid_all + 1, jnp.int32)
    x = jnp.stack([uids, iids], axis=1)   # (B, 2) int32

    # Load-time table prep (pad + pack once, not per forward call).
    packed_table, u_rows_pad = prepare_lookup_tables(u_pre, i_pre)
    packed_table = jax.block_until_ready(packed_table)

    out = lookup_embedding_pretrain(x, packed_table, u_rows_pad)
    out = jax.block_until_ready(out)

    # Pure-JAX reference (same semantics as the torch forward).
    ref = jnp.concatenate(
        [u_pre[x[:, 0]][:, None, :], i_pre[x[:, 1]][:, None, :]], axis=1)

    assert out.shape == (B, 2, emb_dim), out.shape
    assert out.dtype == jnp.float32
    # Exact 0/1 one-hot selection; tolerance only allows for f32 multi-pass
    # MXU rounding (much tighter than the previous 5e-3 so real gather /
    # indexing bugs cannot hide).
    assert jnp.allclose(out, ref, rtol=1e-4, atol=1e-6), "mismatch vs reference gather"
    print("KERNEL_OK")
</pallas_src>

<mosaic_0001>
module attributes {stable_mosaic.version = 11 : i64} {
  func.func @_lookup_kernel(%arg0: i32, %arg1: memref<8x2xi32, #tpu.memory_space<vmem>>, %arg2: memref<256x128xf32, #tpu.memory_space<vmem>>, %arg3: memref<8x256xf32, #tpu.memory_space<vmem>>) attributes {dimension_semantics = [#tpu.dimension_semantics<parallel>], iteration_bounds = array<i64: 1>, scalar_prefetch = 0 : i64, scratch_operands = 0 : i64, tpu.core_type = #tpu.core_type<tc>, window_params = [{transform_indices = @transform_0, window_bounds = array<i64: 8, 2>}, {pipeline_mode = #tpu.pipeline_mode<synchronous>, transform_indices = @transform_1, window_bounds = array<i64: 256, 128>}, {transform_indices = @transform_2, window_bounds = array<i64: 8, 256>}]} {
    %c0 = arith.constant 0 : index
    %c0_0 = arith.constant 0 : index
    %0 = vector.load %arg1[%c0, %c0_0] : memref<8x2xi32, #tpu.memory_space<vmem>>, vector<8x2xi32>
    %1 = vector.extract_strided_slice %0 {offsets = [0, 0], sizes = [8, 1], strides = [1, 1]} : vector<8x2xi32> to vector<8x1xi32>
    %2 = vector.extract_strided_slice %0 {offsets = [0, 1], sizes = [8, 1], strides = [1, 1]} : vector<8x2xi32> to vector<8x1xi32>
    %c128_i32 = arith.constant 128 : i32
    %3 = vector.broadcast %c128_i32 : i32 to vector<8x1xi32>
    %4 = arith.addi %2, %3 : vector<8x1xi32>
    %5 = tpu.concatenate %1, %4 in 0 : vector<8x1xi32>, vector<8x1xi32> -> vector<16x1xi32>
    %6 = tpu.iota {dimensions = array<i32: 1>} : vector<16x256xi32>
    %7 = vector.broadcast %5 : vector<16x1xi32> to vector<16x256xi32>
    %8 = arith.cmpi eq, %7, %6 : vector<16x256xi32>
    %cst = arith.constant 1.000000e+00 : f32
    %cst_1 = arith.constant 0.000000e+00 : f32
    %9 = vector.broadcast %cst : f32 to vector<16x256xf32>
    %10 = vector.broadcast %cst_1 : f32 to vector<16x256xf32>
    %11 = arith.select %8, %9, %10 : vector<16x256xi1>, vector<16x256xf32>
    %c0_2 = arith.constant 0 : index
    %c0_3 = arith.constant 0 : index
    %12 = vector.load %arg2[%c0_2, %c0_3] : memref<256x128xf32, #tpu.memory_space<vmem>>, vector<256x128xf32>
    %cst_4 = arith.constant dense<0.000000e+00> : vector<16x128xf32>
    %13 = tpu.matmul %11, %12, %cst_4 {dimension_numbers = #tpu.dot_dimension_numbers<[1], [0], [0], [1], [0, 0, 1, 1], [], []>} : vector<16x256xf32>, vector<256x128xf32>, vector<16x128xf32> -> vector<16x128xf32>
    %14 = vector.extract_strided_slice %13 {offsets = [0, 0], sizes = [8, 128], strides = [1, 1]} : vector<16x128xf32> to vector<8x128xf32>
    %c0_5 = arith.constant 0 : index
    %c0_6 = arith.constant 0 : index
    %15 = vector.load %arg3[%c0_5, %c0_6] : memref<8x256xf32, #tpu.memory_space<vmem>>, vector<8x128xf32>
    tpu.vector_store %arg3[%c0_5, %c0_6], %14 {strides = array<i32>} : memref<8x256xf32, #tpu.memory_space<vmem>>, vector<8x128xf32>,
    %16 = vector.extract_strided_slice %13 {offsets = [8, 0], sizes = [8, 128], strides = [1, 1]} : vector<16x128xf32> to vector<8x128xf32>
    %c0_7 = arith.constant 0 : index
    %c128 = arith.constant 128 : index
    %17 = vector.load %arg3[%c0_7, %c128] : memref<8x256xf32, #tpu.memory_space<vmem>>, vector<8x128xf32>
    tpu.vector_store %arg3[%c0_7, %c128], %16 {strides = array<i32>} : memref<8x256xf32, #tpu.memory_space<vmem>>, vector<8x128xf32>,
    return
  }
  func.func @transform_0(%arg0: i32) -> (i32, i32) {
    %c0_i32 = arith.constant 0 : i32
    %c0_i32_0 = arith.constant 0 : i32
    return %arg0, %c0_i32 : i32, i32
  }
  func.func @transform_1(%arg0: i32) -> (i32, i32) {
    %c0_i32 = arith.constant 0 : i32
    %c0_i32_0 = arith.constant 0 : i32
    %c0_i32_1 = arith.constant 0 : i32
    return %c0_i32, %c0_i32_0 : i32, i32
  }
  func.func @transform_2(%arg0: i32) -> (i32, i32) {
    %c0_i32 = arith.constant 0 : i32
    %c0_i32_0 = arith.constant 0 : i32
    return %arg0, %c0_i32 : i32, i32
  }
}

module attributes {stable_mosaic.version = 11 : i64} {
  func.func @_lookup_kernel(%arg0: i32, %arg1: memref<8x2xi32, #tpu.memory_space<vmem>>, %arg2: memref<256x128xf32, #tpu.memory_space<vmem>>, %arg3: memref<8x256xf32, #tpu.memory_space<vmem>>) attributes {dimension_semantics = [#tpu.dimension_semantics<parallel>], iteration_bounds = array<i64: 1>, scalar_prefetch = 0 : i64, scratch_operands = 0 : i64, tpu.core_type = #tpu.core_type<tc>, window_params = [{transform_indices = @transform_0, window_bounds = array<i64: 8, 2>}, {pipeline_mode = #tpu.pipeline_mode<synchronous>, transform_indices = @transform_1, window_bounds = array<i64: 256, 128>}, {transform_indices = @transform_2, window_bounds = array<i64: 8, 256>}]} {
    %c0 = arith.constant 0 : index
    %c0_0 = arith.constant 0 : index
    %0 = vector.load %arg1[%c0, %c0_0] : memref<8x2xi32, #tpu.memory_space<vmem>>, vector<8x2xi32>
    %1 = vector.extract_strided_slice %0 {offsets = [0, 0], sizes = [8, 1], strides = [1, 1]} : vector<8x2xi32> to vector<8x1xi32>
    %2 = vector.extract_strided_slice %0 {offsets = [0, 1], sizes = [8, 1], strides = [1, 1]} : vector<8x2xi32> to vector<8x1xi32>
    %c128_i32 = arith.constant 128 : i32
    %3 = vector.broadcast %c128_i32 : i32 to vector<8x1xi32>
    %4 = arith.addi %2, %3 : vector<8x1xi32>
    %5 = tpu.concatenate %1, %4 in 0 : vector<8x1xi32>, vector<8x1xi32> -> vector<16x1xi32>
    %6 = tpu.iota {dimensions = array<i32: 1>} : vector<16x256xi32>
    %7 = vector.broadcast %5 : vector<16x1xi32> to vector<16x256xi32>
    %8 = arith.cmpi eq, %7, %6 : vector<16x256xi32>
    %cst = arith.constant 1.000000e+00 : f32
    %cst_1 = arith.constant 0.000000e+00 : f32
    %9 = vector.broadcast %cst : f32 to vector<16x256xf32>
    %10 = vector.broadcast %cst_1 : f32 to vector<16x256xf32>
    %11 = arith.select %8, %9, %10 : vector<16x256xi1>, vector<16x256xf32>
    %c0_2 = arith.constant 0 : index
    %c0_3 = arith.constant 0 : index
    %12 = vector.load %arg2[%c0_2, %c0_3] : memref<256x128xf32, #tpu.memory_space<vmem>>, vector<256x128xf32>
    %cst_4 = arith.constant dense<0.000000e+00> : vector<16x128xf32>
    %13 = tpu.matmul %11, %12, %cst_4 {dimension_numbers = #tpu.dot_dimension_numbers<[1], [0], [0], [1], [0, 0, 1, 1], [], []>} : vector<16x256xf32>, vector<256x128xf32>, vector<16x128xf32> -> vector<16x128xf32>
    %14 = vector.extract_strided_slice %13 {offsets = [0, 0], sizes = [8, 128], strides = [1, 1]} : vector<16x128xf32> to vector<8x128xf32>
    %c0_5 = arith.constant 0 : index
    %c0_6 = arith.constant 0 : index
    %15 = vector.load %arg3[%c0_5, %c0_6] : memref<8x256xf32, #tpu.memory_space<vmem>>, vector<8x128xf32>
    tpu.vector_store %arg3[%c0_5, %c0_6], %14 {strides = array<i32>} : memref<8x256xf32, #tpu.memory_space<vmem>>, vector<8x128xf32>,
    %16 = vector.extract_strided_slice %13 {offsets = [8, 0], sizes = [8, 128], strides = [1, 1]} : vector<16x128xf32> to vector<8x128xf32>
    %c0_7 = arith.constant 0 : index
    %c128 = arith.constant 128 : index
    %17 = vector.load %arg3[%c0_7, %c128] : memref<8x256xf32, #tpu.memory_space<vmem>>, vector<8x128xf32>
    tpu.vector_store %arg3[%c0_7, %c128], %16 {strides = array<i32>} : memref<8x256xf32, #tpu.memory_space<vmem>>, vector<8x128xf32>,
    return
  }
  func.func @transform_0(%arg0: i32) -> (i32, i32) {
    %c0_i32 = arith.constant 0 : i32
    %c0_i32_0 = arith.constant 0 : i32
    return %arg0, %c0_i32 : i32, i32
  }
  func.func @transform_1(%arg0: i32) -> (i32, i32) {
    %c0_i32 = arith.constant 0 : i32
    %c0_i32_0 = arith.constant 0 : i32
    %c0_i32_1 = arith.constant 0 : i32
    return %c0_i32, %c0_i32_0 : i32, i32
  }
  func.func @transform_2(%arg0: i32) -> (i32, i32) {
    %c0_i32 = arith.constant 0 : i32
    %c0_i32_0 = arith.constant 0 : i32
    return %arg0, %c0_i32 : i32, i32
  }
}

</mosaic_0001>

<llo_original>
// kernel: tpu_custom_call.1
$region0: #{tpu_custom_call.1}
  #allocation0 [shape = 'u32[]', space=smem, size = 0x4, offset = 0x4, fixed_abs, tag = 'smem constant byte address 0x4 - core index']
  #allocation1 [shape = 'u32[144,128]{1,0:T(1,128)}', space=vmem, size = 0x12000, scoped, tag = 'internal scratch']
  %s0 = inlined_call_operand.vmem [shape: s32[8,2], index: 0, kind: input, shape index: {}]
  %s1 = inlined_call_operand.hbm [shape: f32[256,128], index: 1, kind: input, shape index: {}]
  %s2 = inlined_call_operand.hbm [shape: f32[8,256], index: 2, kind: output, shape index: {}]
  %s3 = sld [smem:[#allocation0]]
  $region22: #{tpu_custom_call.1} parent=0
    _
  %s5 = ssub.s32 1, %s3
  %s6 = scalar_select 0, %s5, %s3
  $region1: #{tpu_custom_call.1} parent=0
    #allocation2 [shape = 'u8[131072]{0}', space=vmem, size = 0x20000, scoped, tag = 'input window, operand 1, single buffered']
    #allocation3 [shape = 's32[1]{0}', space=sflag, size = 0x4, scoped, tag = 'scoped memory for tpu_custom_call.1']
    #allocation4 [shape = 's32[1]{0}', space=sflag, size = 0x4, scoped, tag = 'scoped memory for tpu_custom_call.1']
    #allocation5 [shape = 'u8[8192]{0}', space=vmem, size = 0x2000, scoped, tag = 'output window, operand 0, single buffered']
    %7 = vsyncpa [#allocation3], 0
    %8 = vsyncpa [#allocation4], 0
    // Predicated region
    $region2: #{tpu_custom_call.1} parent=1 // pred_check
      _
    $region3: #{tpu_custom_call.1} parent=1 // pred_check_branch
      %10 = sbr.rel (0) target = $region5
    $region4: #{tpu_custom_call.1} parent=1 // pred_region
      _
    $region5: #{tpu_custom_call.1} parent=1 // pred_fallthru
      _
    // Predicated region
    $region6: #{tpu_custom_call.1} parent=1 // pred_check
      _
    $region7: #{tpu_custom_call.1} parent=1 // pred_check_branch
      %12 = sbr.rel (0) target = $region9
    $region8: #{tpu_custom_call.1} parent=1 // pred_region
      %s14 = ssub.s32 4096, 4096
      %15 = vsyncadd [#allocation3], %s14
      %s16 = sshll.u32 [#allocation2], 4
      %s17 = int_to_ptr.vmem [resolvable:$true] %s16
      %22 = dma.hbm_to_vmem [thread:$0]  %s1, 4096, %s17, [#allocation3], 128, 128, 8
    $region9: #{tpu_custom_call.1} parent=1 // pred_fallthru
      _
    // Predicated region
    $region10: #{tpu_custom_call.1} parent=1 // pred_check
      _
    $region11: #{tpu_custom_call.1} parent=1 // pred_check_branch
      %24 = sbr.rel (0) target = $region13
    $region12: #{tpu_custom_call.1} parent=1 // pred_region
      %25 = dma.done [#allocation3], 4096
    $region13: #{tpu_custom_call.1} parent=1 // pred_fallthru
      _
    %v26 = vld [vmem:[%s0] sm:$0xff]
    %v27 = vadd.s32 %v26, 128
    %28 = vrot.lane.b32.xlu0 %v27, 127
    %v29 = vpop.permute.xlu0 %28
    %v30 = vlaneseq
    %v31 = vand.u32 %v30, 127
    %v32 = vadd.s32 %v31, 128
    %33 = vset.pattern.permute.xlu0 0
    %34 = vperm.xlu0 %33, %v26
    %v35 = vpop.permute.xlu0 %34
    %36 = vset.pattern.permute.xlu0 0
    %37 = vperm.xlu0 %36, %v29
    %v38 = vpop.permute.xlu0 %37
    %vm39 = vcmp.eq.s32.totalorder %v35, %v31
    %vm40 = vcmp.eq.s32.totalorder %v35, %v32
    %vm41 = vcmp.eq.s32.totalorder %v38, %v31
    %vm42 = vcmp.eq.s32.totalorder %v38, %v32
    %v43 = vsel %vm39, 1.0, 0.0
    %v44 = vsel %vm40, 1.0, 0.0
    %v45 = vsel %vm41, 1.0, 0.0
    %v46 = vsel %vm42, 1.0, 0.0
    %v47 = vld [vmem:[#allocation2] sm:$0xff]
    %v48 = vld [vmem:[#allocation2 + $0x8] sm:$0xff]
    %v49 = vld [vmem:[#allocation2 + $0x10] sm:$0xff]
    %v50 = vld [vmem:[#allocation2 + $0x18] sm:$0xff]
    %v51 = vld [vmem:[#allocation2 + $0x20] sm:$0xff]
    %v52 = vld [vmem:[#allocation2 + $0x28] sm:$0xff]
    %v53 = vld [vmem:[#allocation2 + $0x30] sm:$0xff]
    %v54 = vld [vmem:[#allocation2 + $0x38] sm:$0xff]
    %v55 = vld [vmem:[#allocation2 + $0x40] sm:$0xff]
    %v56 = vld [vmem:[#allocation2 + $0x48] sm:$0xff]
    %v57 = vld [vmem:[#allocation2 + $0x50] sm:$0xff]
    %v58 = vld [vmem:[#allocation2 + $0x58] sm:$0xff]
    %v59 = vld [vmem:[#allocation2 + $0x60] sm:$0xff]
    %v60 = vld [vmem:[#allocation2 + $0x68] sm:$0xff]
    %v61 = vld [vmem:[#allocation2 + $0x70] sm:$0xff]
    %v62 = vld [vmem:[#allocation2 + $0x78] sm:$0xff]
    %v63 = vld [vmem:[#allocation2 + $0x80] sm:$0xff]
    %v64 = vld [vmem:[#allocation2 + $0x88] sm:$0xff]
    %v65 = vld [vmem:[#allocation2 + $0x90] sm:$0xff]
    %v66 = vld [vmem:[#allocation2 + $0x98] sm:$0xff]
    %v67 = vld [vmem:[#allocation2 + $0xa0] sm:$0xff]
    %v68 = vld [vmem:[#allocation2 + $0xa8] sm:$0xff]
    %v69 = vld [vmem:[#allocation2 + $0xb0] sm:$0xff]
    %v70 = vld [vmem:[#allocation2 + $0xb8] sm:$0xff]
    %v71 = vld [vmem:[#allocation2 + $0xc0] sm:$0xff]
    %v72 = vld [vmem:[#allocation2 + $0xc8] sm:$0xff]
    %v73 = vld [vmem:[#allocation2 + $0xd0] sm:$0xff]
    %v74 = vld [vmem:[#allocation2 + $0xd8] sm:$0xff]
    %v75 = vld [vmem:[#allocation2 + $0xe0] sm:$0xff]
    %v76 = vld [vmem:[#allocation2 + $0xe8] sm:$0xff]
    %v77 = vld [vmem:[#allocation2 + $0xf0] sm:$0xff]
    %v78 = vld [vmem:[#allocation2 + $0xf8] sm:$0xff]
    %79 = vmatprep.subr.mxu0 0.0
    %80 = vmatpush1.msra.mxu0 %v47
    %81 = vmatprep.subr.mxu0 0.0
    %82 = vmatpush1.msra.mxu0 %v48
    %83 = vmatprep.subr.mxu0 0.0
    %84 = vmatpush1.msra.mxu0 %v49
    %85 = vmatprep.subr.mxu0 0.0
    %86 = vmatpush1.msra.mxu0 %v50
    %87 = vmatprep.subr.mxu0 0.0
    %88 = vmatpush1.msra.mxu0 %v51
    %89 = vmatprep.subr.mxu0 0.0
    %90 = vmatpush1.msra.mxu0 %v52
    %91 = vmatprep.subr.mxu0 0.0
    %92 = vmatpush1.msra.mxu0 %v53
    %93 = vmatprep.subr.mxu0 0.0
    %94 = vmatpush1.msra.mxu0 %v54
    %95 = vmatprep.subr.mxu0 0.0
    %96 = vmatpush1.msra.mxu0 %v55
    %97 = vmatprep.subr.mxu0 0.0
    %98 = vmatpush1.msra.mxu0 %v56
    %99 = vmatprep.subr.mxu0 0.0
    %100 = vmatpush1.msra.mxu0 %v57
    %101 = vmatprep.subr.mxu0 0.0
    %102 = vmatpush1.msra.mxu0 %v58
    %103 = vmatprep.subr.mxu0 0.0
    %104 = vmatpush1.msra.mxu0 %v59
    %105 = vmatprep.subr.mxu0 0.0
    %106 = vmatpush1.msra.mxu0 %v60
    %107 = vmatprep.subr.mxu0 0.0
    %108 = vmatpush1.msra.mxu0 %v61
    %109 = vmatprep.subr.mxu0 0.0
    %110 = vmatpush1.msra.mxu0 %v62
    %111 = vmatprep.subr.mxu0 0.0
    %112 = vmatpush1.msra.mxu0 %v63
    %113 = vmatprep.subr.mxu0 0.0
    %114 = vmatpush1.msra.mxu0 %v64
    %115 = vmatprep.subr.mxu0 0.0
    %116 = vmatpush1.msra.mxu0 %v65
    %117 = vmatprep.subr.mxu0 0.0
    %118 = vmatpush1.msra.mxu0 %v66
    %119 = vmatprep.subr.mxu0 0.0
    %120 = vmatpush1.msra.mxu0 %v67
    %121 = vmatprep.subr.mxu0 0.0
    %122 = vmatpush1.msra.mxu0 %v68
    %123 = vmatprep.subr.mxu0 0.0
    %124 = vmatpush1.msra.mxu0 %v69
    %125 = vmatprep.subr.mxu0 0.0
    %126 = vmatpush1.msra.mxu0 %v70
    %127 = vmatprep.subr.mxu0 0.0
    %128 = vmatpush1.msra.mxu0 %v71
    %129 = vmatprep.subr.mxu0 0.0
    %130 = vmatpush1.msra.mxu0 %v72
    %131 = vmatprep.subr.mxu0 0.0
    %132 = vmatpush1.msra.mxu0 %v73
    %133 = vmatprep.subr.mxu0 0.0
    %134 = vmatpush1.msra.mxu0 %v74
    %135 = vmatprep.subr.mxu0 0.0
    %136 = vmatpush1.msra.mxu0 %v75
    %137 = vmatprep.subr.mxu0 0.0
    %138 = vmatpush1.msra.mxu0 %v76
    %139 = vmatprep.subr.mxu0 0.0
    %140 = vmatpush1.msra.mxu0 %v77
    %141 = vmatprep.subr.mxu0 0.0
    %142 = vmatpush1.msra.mxu0 %v78
    %143 = vmatprep.mubr.f32.mxu0 %v44
    %144 = vmatmul.mubr.f32.gmra.mrb[0].mxu0 %v43
    %v145 = vpop.f32.mrb[0].mxu0
    %v146 = vadd.f32 0.0, %v145
    %v147 = vpop.f32.mrb[0].mxu0
    %148 = vmatprep.mubr.f32.mxu0 %v46
    %149 = vmatmul.mubr.f32.gmra.mrb[0].mxu0 %v45
    %v150 = vpop.f32.mrb[0].mxu0
    %v151 = vadd.f32 0.0, %v150
    %v152 = vpop.f32.mrb[0].mxu0
    %153 = vdwg.mxu0
    %154 = vst [vmem:[#allocation5] sm:$0xff] %v146
    %155 = vst [vmem:[#allocation5 + $0x8] sm:$0xff] %v151
    // Predicated region
    $region14: #{tpu_custom_call.1} parent=1 // pred_check
      _
    $region15: #{tpu_custom_call.1} parent=1 // pred_check_branch
      %157 = sbr.rel (0) target = $region17
    $region16: #{tpu_custom_call.1} parent=1 // pred_region
      %s159 = ssub.s32 256, 256
      %160 = vsyncadd [#allocation4], %s159
      %s162 = sshll.u32 [#allocation5], 4
      %s163 = int_to_ptr.vmem [resolvable:$true] %s162
      %165 = dma.vmem_to_hbm [thread:$0]  %s163, 256, %s2, [#allocation4]
    $region17: #{tpu_custom_call.1} parent=1 // pred_fallthru
      _
    // Predicated region
    $region18: #{tpu_custom_call.1} parent=1 // pred_check
      _
    $region19: #{tpu_custom_call.1} parent=1 // pred_check_branch
      %167 = sbr.rel (0) target = $region21
    $region20: #{tpu_custom_call.1} parent=1 // pred_region
      %168 = dma.done [#allocation4], 256
    $region21: #{tpu_custom_call.1} parent=1 // pred_fallthru
      _
    %169 = vsyncpa [#allocation3], 1
    %170 = vsyncpa [#allocation4], 1

// kernel: tpu_custom_call.1
$region0: #{tpu_custom_call.1}
  #allocation0 [shape = 'u32[]', space=smem, size = 0x4, offset = 0x4, fixed_abs, tag = 'smem constant byte address 0x4 - core index']
  #allocation1 [shape = 'u32[144,128]{1,0:T(1,128)}', space=vmem, size = 0x12000, scoped, tag = 'internal scratch']
  %s0 = inlined_call_operand.vmem [shape: s32[8,2], index: 0, kind: input, shape index: {}]
  %s1 = inlined_call_operand.hbm [shape: f32[256,128], index: 1, kind: input, shape index: {}]
  %s2 = inlined_call_operand.hbm [shape: f32[8,256], index: 2, kind: output, shape index: {}]
  %s3 = sld [smem:[#allocation0]]
  $region22: #{tpu_custom_call.1} parent=0
    _
  %s5 = ssub.s32 1, %s3
  %s6 = scalar_select 0, %s5, %s3
  $region1: #{tpu_custom_call.1} parent=0
    #allocation2 [shape = 'u8[131072]{0}', space=vmem, size = 0x20000, scoped, tag = 'input window, operand 1, single buffered']
    #allocation3 [shape = 's32[1]{0}', space=sflag, size = 0x4, scoped, tag = 'scoped memory for tpu_custom_call.1']
    #allocation4 [shape = 's32[1]{0}', space=sflag, size = 0x4, scoped, tag = 'scoped memory for tpu_custom_call.1']
    #allocation5 [shape = 'u8[8192]{0}', space=vmem, size = 0x2000, scoped, tag = 'output window, operand 0, single buffered']
    %7 = vsyncpa [#allocation3], 0
    %8 = vsyncpa [#allocation4], 0
    // Predicated region
    $region2: #{tpu_custom_call.1} parent=1 // pred_check
      _
    $region3: #{tpu_custom_call.1} parent=1 // pred_check_branch
      %10 = sbr.rel (0) target = $region5
    $region4: #{tpu_custom_call.1} parent=1 // pred_region
      _
    $region5: #{tpu_custom_call.1} parent=1 // pred_fallthru
      _
    // Predicated region
    $region6: #{tpu_custom_call.1} parent=1 // pred_check
      _
    $region7: #{tpu_custom_call.1} parent=1 // pred_check_branch
      %12 = sbr.rel (0) target = $region9
    $region8: #{tpu_custom_call.1} parent=1 // pred_region
      %s14 = ssub.s32 4096, 4096
      %15 = vsyncadd [#allocation3], %s14
      %s16 = sshll.u32 [#allocation2], 4
      %s17 = int_to_ptr.vmem [resolvable:$true] %s16
      %22 = dma.hbm_to_vmem [thread:$0]  %s1, 4096, %s17, [#allocation3], 128, 128, 8
    $region9: #{tpu_custom_call.1} parent=1 // pred_fallthru
      _
    // Predicated region
    $region10: #{tpu_custom_call.1} parent=1 // pred_check
      _
    $region11: #{tpu_custom_call.1} parent=1 // pred_check_branch
      %24 = sbr.rel (0) target = $region13
    $region12: #{tpu_custom_call.1} parent=1 // pred_region
      %25 = dma.done [#allocation3], 4096
    $region13: #{tpu_custom_call.1} parent=1 // pred_fallthru
      _
    %v26 = vld [vmem:[%s0] sm:$0xff]
    %v27 = vadd.s32 %v26, 128
    %28 = vrot.lane.b32.xlu0 %v27, 127
    %v29 = vpop.permute.xlu0 %28
    %v30 = vlaneseq
    %v31 = vand.u32 %v30, 127
    %v32 = vadd.s32 %v31, 128
    %33 = vset.pattern.permute.xlu0 0
    %34 = vperm.xlu0 %33, %v26
    %v35 = vpop.permute.xlu0 %34
    %36 = vset.pattern.permute.xlu0 0
    %37 = vperm.xlu0 %36, %v29
    %v38 = vpop.permute.xlu0 %37
    %vm39 = vcmp.eq.s32.totalorder %v35, %v31
    %vm40 = vcmp.eq.s32.totalorder %v35, %v32
    %vm41 = vcmp.eq.s32.totalorder %v38, %v31
    %vm42 = vcmp.eq.s32.totalorder %v38, %v32
    %v43 = vsel %vm39, 1.0, 0.0
    %v44 = vsel %vm40, 1.0, 0.0
    %v45 = vsel %vm41, 1.0, 0.0
    %v46 = vsel %vm42, 1.0, 0.0
    %v47 = vld [vmem:[#allocation2] sm:$0xff]
    %v48 = vld [vmem:[#allocation2 + $0x8] sm:$0xff]
    %v49 = vld [vmem:[#allocation2 + $0x10] sm:$0xff]
    %v50 = vld [vmem:[#allocation2 + $0x18] sm:$0xff]
    %v51 = vld [vmem:[#allocation2 + $0x20] sm:$0xff]
    %v52 = vld [vmem:[#allocation2 + $0x28] sm:$0xff]
    %v53 = vld [vmem:[#allocation2 + $0x30] sm:$0xff]
    %v54 = vld [vmem:[#allocation2 + $0x38] sm:$0xff]
    %v55 = vld [vmem:[#allocation2 + $0x40] sm:$0xff]
    %v56 = vld [vmem:[#allocation2 + $0x48] sm:$0xff]
    %v57 = vld [vmem:[#allocation2 + $0x50] sm:$0xff]
    %v58 = vld [vmem:[#allocation2 + $0x58] sm:$0xff]
    %v59 = vld [vmem:[#allocation2 + $0x60] sm:$0xff]
    %v60 = vld [vmem:[#allocation2 + $0x68] sm:$0xff]
    %v61 = vld [vmem:[#allocation2 + $0x70] sm:$0xff]
    %v62 = vld [vmem:[#allocation2 + $0x78] sm:$0xff]
    %v63 = vld [vmem:[#allocation2 + $0x80] sm:$0xff]
    %v64 = vld [vmem:[#allocation2 + $0x88] sm:$0xff]
    %v65 = vld [vmem:[#allocation2 + $0x90] sm:$0xff]
    %v66 = vld [vmem:[#allocation2 + $0x98] sm:$0xff]
    %v67 = vld [vmem:[#allocation2 + $0xa0] sm:$0xff]
    %v68 = vld [vmem:[#allocation2 + $0xa8] sm:$0xff]
    %v69 = vld [vmem:[#allocation2 + $0xb0] sm:$0xff]
    %v70 = vld [vmem:[#allocation2 + $0xb8] sm:$0xff]
    %v71 = vld [vmem:[#allocation2 + $0xc0] sm:$0xff]
    %v72 = vld [vmem:[#allocation2 + $0xc8] sm:$0xff]
    %v73 = vld [vmem:[#allocation2 + $0xd0] sm:$0xff]
    %v74 = vld [vmem:[#allocation2 + $0xd8] sm:$0xff]
    %v75 = vld [vmem:[#allocation2 + $0xe0] sm:$0xff]
    %v76 = vld [vmem:[#allocation2 + $0xe8] sm:$0xff]
    %v77 = vld [vmem:[#allocation2 + $0xf0] sm:$0xff]
    %v78 = vld [vmem:[#allocation2 + $0xf8] sm:$0xff]
    %79 = vmatprep.subr.mxu0 0.0
    %80 = vmatpush1.msra.mxu0 %v47
    %81 = vmatprep.subr.mxu0 0.0
    %82 = vmatpush1.msra.mxu0 %v48
    %83 = vmatprep.subr.mxu0 0.0
    %84 = vmatpush1.msra.mxu0 %v49
    %85 = vmatprep.subr.mxu0 0.0
    %86 = vmatpush1.msra.mxu0 %v50
    %87 = vmatprep.subr.mxu0 0.0
    %88 = vmatpush1.msra.mxu0 %v51
    %89 = vmatprep.subr.mxu0 0.0
    %90 = vmatpush1.msra.mxu0 %v52
    %91 = vmatprep.subr.mxu0 0.0
    %92 = vmatpush1.msra.mxu0 %v53
    %93 = vmatprep.subr.mxu0 0.0
    %94 = vmatpush1.msra.mxu0 %v54
    %95 = vmatprep.subr.mxu0 0.0
    %96 = vmatpush1.msra.mxu0 %v55
    %97 = vmatprep.subr.mxu0 0.0
    %98 = vmatpush1.msra.mxu0 %v56
    %99 = vmatprep.subr.mxu0 0.0
    %100 = vmatpush1.msra.mxu0 %v57
    %101 = vmatprep.subr.mxu0 0.0
    %102 = vmatpush1.msra.mxu0 %v58
    %103 = vmatprep.subr.mxu0 0.0
    %104 = vmatpush1.msra.mxu0 %v59
    %105 = vmatprep.subr.mxu0 0.0
    %106 = vmatpush1.msra.mxu0 %v60
    %107 = vmatprep.subr.mxu0 0.0
    %108 = vmatpush1.msra.mxu0 %v61
    %109 = vmatprep.subr.mxu0 0.0
    %110 = vmatpush1.msra.mxu0 %v62
    %111 = vmatprep.subr.mxu0 0.0
    %112 = vmatpush1.msra.mxu0 %v63
    %113 = vmatprep.subr.mxu0 0.0
    %114 = vmatpush1.msra.mxu0 %v64
    %115 = vmatprep.subr.mxu0 0.0
    %116 = vmatpush1.msra.mxu0 %v65
    %117 = vmatprep.subr.mxu0 0.0
    %118 = vmatpush1.msra.mxu0 %v66
    %119 = vmatprep.subr.mxu0 0.0
    %120 = vmatpush1.msra.mxu0 %v67
    %121 = vmatprep.subr.mxu0 0.0
    %122 = vmatpush1.msra.mxu0 %v68
    %123 = vmatprep.subr.mxu0 0.0
    %124 = vmatpush1.msra.mxu0 %v69
    %125 = vmatprep.subr.mxu0 0.0
    %126 = vmatpush1.msra.mxu0 %v70
    %127 = vmatprep.subr.mxu0 0.0
    %128 = vmatpush1.msra.mxu0 %v71
    %129 = vmatprep.subr.mxu0 0.0
    %130 = vmatpush1.msra.mxu0 %v72
    %131 = vmatprep.subr.mxu0 0.0
    %132 = vmatpush1.msra.mxu0 %v73
    %133 = vmatprep.subr.mxu0 0.0
    %134 = vmatpush1.msra.mxu0 %v74
    %135 = vmatprep.subr.mxu0 0.0
    %136 = vmatpush1.msra.mxu0 %v75
    %137 = vmatprep.subr.mxu0 0.0
    %138 = vmatpush1.msra.mxu0 %v76
    %139 = vmatprep.subr.mxu0 0.0
    %140 = vmatpush1.msra.mxu0 %v77
    %141 = vmatprep.subr.mxu0 0.0
    %142 = vmatpush1.msra.mxu0 %v78
    %143 = vmatprep.mubr.f32.mxu0 %v44
    %144 = vmatmul.mubr.f32.gmra.mrb[0].mxu0 %v43
    %v145 = vpop.f32.mrb[0].mxu0
    %v146 = vadd.f32 0.0, %v145
    %v147 = vpop.f32.mrb[0].mxu0
    %148 = vmatprep.mubr.f32.mxu0 %v46
    %149 = vmatmul.mubr.f32.gmra.mrb[0].mxu0 %v45
    %v150 = vpop.f32.mrb[0].mxu0
    %v151 = vadd.f32 0.0, %v150
    %v152 = vpop.f32.mrb[0].mxu0
    %153 = vdwg.mxu0
    %154 = vst [vmem:[#allocation5] sm:$0xff] %v146
    %155 = vst [vmem:[#allocation5 + $0x8] sm:$0xff] %v151
    // Predicated region
    $region14: #{tpu_custom_call.1} parent=1 // pred_check
      _
    $region15: #{tpu_custom_call.1} parent=1 // pred_check_branch
      %157 = sbr.rel (0) target = $region17
    $region16: #{tpu_custom_call.1} parent=1 // pred_region
      %s159 = ssub.s32 256, 256
      %160 = vsyncadd [#allocation4], %s159
      %s162 = sshll.u32 [#allocation5], 4
      %s163 = int_to_ptr.vmem [resolvable:$true] %s162
      %165 = dma.vmem_to_hbm [thread:$0]  %s163, 256, %s2, [#allocation4]
    $region17: #{tpu_custom_call.1} parent=1 // pred_fallthru
      _
    // Predicated region
    $region18: #{tpu_custom_call.1} parent=1 // pred_check
      _
    $region19: #{tpu_custom_call.1} parent=1 // pred_check_branch
      %167 = sbr.rel (0) target = $region21
    $region20: #{tpu_custom_call.1} parent=1 // pred_region
      %168 = dma.done [#allocation4], 256
    $region21: #{tpu_custom_call.1} parent=1 // pred_fallthru
      _
    %169 = vsyncpa [#allocation3], 1
    %170 = vsyncpa [#allocation4], 1

</llo_original>
